<compile_context>
chip_gen: v5e
topology: v5e:2x2
jax: 0.10.0
libtpu: 0.0.40
codegen_flags: <defaults>
</compile_context>

<pallas_src>
import jax
import jax.numpy as jnp
from jax.experimental import pallas as pl
from jax.experimental.pallas import tpu as pltpu


def _round_up(x, m):
    return (x + m - 1) // m * m


def _cdiv(a, b):
    return -(-a // b)


def _linear_kernel(x_ref, w_ref, b_ref, o_ref):
    # x_ref: (TB, F) f32 VMEM tile (batch strip, pipelined by BlockSpec)
    # w_ref: (F, 1)  f32 VMEM, resident across the grid
    # b_ref: (1,)    f32 scalar in SMEM
    # o_ref: (TB, 1) f32 output block
    y = jnp.dot(x_ref[...], w_ref[...], preferred_element_type=jnp.float32)  # MXU matvec
    o_ref[...] = y + b_ref[0]


def linear_regression_forward(x, w, b, *, tile_bytes_budget=12 << 20,
                              vmem_limit_bytes=48 * 1024 * 1024):
    """Pallas equivalent of nn.Linear(in_features, 1).forward(x).

    x: (B, F) float32
    w: (1, F) float32   (nn.Linear weight layout)
    b: (1,)  float32    (nn.Linear bias)
    returns: (B, 1) float32
    """
    B, F = x.shape
    x = x.astype(jnp.float32)
    w_col = jnp.asarray(w, jnp.float32).reshape(F, 1)   # (F, 1) column for the MXU
    b = jnp.asarray(b, jnp.float32).reshape(1)

    # Batch tile: byte-budget driven, rounded to a multiple of 128 rows
    # (unmasked, lane-aligned DMAs + negligible per-grid-step overhead).
    rows_for_budget = max(128, (tile_bytes_budget // (F * 4)) // 128 * 128)
    # Cap so moderate batches still produce >= 2 grid steps (v7x dual-TC sharding).
    rows_for_split = _round_up(max(1, _cdiv(B, 2)), 128)
    tb = int(min(rows_for_budget, rows_for_split))
    grid_b = _cdiv(B, tb)          # no jnp.pad of x -> no extra HBM read/write
    b_pad = grid_b * tb

    # TODO(synk): for in_features so large that a (128, F) f32 strip exceeds the
    # VMEM budget, also tile the reduction axis (grid=(grid_b, F//TF) with an f32
    # VMEM accumulator initialized/finalized via pl.when).

    out = pl.pallas_call(
        _linear_kernel,
        out_shape=jax.ShapeDtypeStruct((b_pad, 1), jnp.float32),
        grid=(grid_b,),
        in_specs=[
            pl.BlockSpec((tb, F), lambda i: (i, 0)),             # x: batch-tiled
            pl.BlockSpec((F, 1), lambda i: (0, 0)),              # w: resident column
            pl.BlockSpec(memory_space=pltpu.MemorySpace.SMEM),   # bias scalar
        ],
        out_specs=pl.BlockSpec((tb, 1), lambda i: (i, 0)),
        compiler_params=pltpu.CompilerParams(
            dimension_semantics=("parallel",),   # engages both TCs on v7x
            vmem_limit_bytes=vmem_limit_bytes,
        ),
    )(x, w_col, b)

    # Rows >= B (written from undefined OOB reads of the last partial x tile)
    # are discarded here; valid rows never depend on them.
    return out[:B]


if __name__ == "__main__":
    key = jax.random.PRNGKey(0)
    kx, kw, kb = jax.random.split(key, 3)

    batch = 8
    in_features = 32

    x = jax.random.normal(kx, (batch, in_features), dtype=jnp.float32)
    # Deterministic parameter init (mimicking nn.Linear's uniform bound 1/sqrt(F)).
    bound = 1.0 / jnp.sqrt(jnp.float32(in_features))
    w = jax.random.uniform(kw, (1, in_features), jnp.float32, -bound, bound)
    b = jax.random.uniform(kb, (1,), jnp.float32, -bound, bound)

    out = linear_regression_forward(x, w, b)
    out = jax.block_until_ready(out)

    ref = x @ w.T + b
    assert out.shape == (batch, 1)
    assert jnp.allclose(out, ref, atol=1e-5), "mismatch vs reference"

    # Second check: ragged batch with a multi-tile grid (exercises the
    # no-pad / partial-last-tile path and the dual-tile split).
    kx2 = jax.random.fold_in(kx, 1)
    x2 = jax.random.normal(kx2, (300, in_features), dtype=jnp.float32)
    out2 = jax.block_until_ready(linear_regression_forward(x2, w, b))
    ref2 = x2 @ w.T + b
    assert out2.shape == (300, 1)
    assert jnp.allclose(out2, ref2, atol=1e-5), "mismatch vs reference (tiled)"

    print("KERNEL_OK")
</pallas_src>

<mosaic_0001>
module attributes {stable_mosaic.version = 11 : i64} {
  func.func @_linear_kernel(%arg0: i32, %arg1: memref<128x32xf32, #tpu.memory_space<vmem>>, %arg2: memref<32x1xf32, #tpu.memory_space<vmem>>, %arg3: memref<1xf32, #tpu.memory_space<smem>>, %arg4: memref<128x1xf32, #tpu.memory_space<vmem>>) attributes {dimension_semantics = [#tpu.dimension_semantics<parallel>], iteration_bounds = array<i64: 1>, scalar_prefetch = 0 : i64, scratch_operands = 0 : i64, tpu.core_type = #tpu.core_type<tc>, window_params = [{transform_indices = @transform_0, window_bounds = array<i64: 128, 32>}, {pipeline_mode = #tpu.pipeline_mode<synchronous>, transform_indices = @transform_1, window_bounds = array<i64: 32, 1>}, {transform_indices = @transform_2, window_bounds = array<i64: 1>}, {transform_indices = @transform_3, window_bounds = array<i64: 128, 1>}]} {
    %c0 = arith.constant 0 : index
    %c0_0 = arith.constant 0 : index
    %0 = vector.load %arg1[%c0, %c0_0] : memref<128x32xf32, #tpu.memory_space<vmem>>, vector<128x32xf32>
    %c0_1 = arith.constant 0 : index
    %c0_2 = arith.constant 0 : index
    %1 = vector.load %arg2[%c0_1, %c0_2] : memref<32x1xf32, #tpu.memory_space<vmem>>, vector<32x1xf32>
    %cst = arith.constant dense<0.000000e+00> : vector<128x1xf32>
    %2 = tpu.matmul %0, %1, %cst {dimension_numbers = #tpu.dot_dimension_numbers<[1], [0], [0], [1], [0, 0, 1, 1], [], []>} : vector<128x32xf32>, vector<32x1xf32>, vector<128x1xf32> -> vector<128x1xf32>
    %c0_3 = arith.constant 0 : index
    %3 = memref.load %arg3[%c0_3] : memref<1xf32, #tpu.memory_space<smem>>
    %4 = vector.broadcast %3 : f32 to vector<128x1xf32>
    %5 = arith.addf %2, %4 : vector<128x1xf32>
    %c0_4 = arith.constant 0 : index
    %c0_5 = arith.constant 0 : index
    %6 = vector.load %arg4[%c0_4, %c0_5] : memref<128x1xf32, #tpu.memory_space<vmem>>, vector<128x1xf32>
    tpu.vector_store %arg4[%c0_4, %c0_5], %5 {strides = array<i32>} : memref<128x1xf32, #tpu.memory_space<vmem>>, vector<128x1xf32>,
    return
  }
  func.func @transform_0(%arg0: i32) -> (i32, i32) {
    %c0_i32 = arith.constant 0 : i32
    %c0_i32_0 = arith.constant 0 : i32
    return %arg0, %c0_i32 : i32, i32
  }
  func.func @transform_1(%arg0: i32) -> (i32, i32) {
    %c0_i32 = arith.constant 0 : i32
    %c0_i32_0 = arith.constant 0 : i32
    %c0_i32_1 = arith.constant 0 : i32
    return %c0_i32, %c0_i32_0 : i32, i32
  }
  func.func @transform_2(%arg0: i32) -> i32 {
    %c0_i32 = arith.constant 0 : i32
    %c0_i32_0 = arith.constant 0 : i32
    return %c0_i32 : i32
  }
  func.func @transform_3(%arg0: i32) -> (i32, i32) {
    %c0_i32 = arith.constant 0 : i32
    %c0_i32_0 = arith.constant 0 : i32
    return %arg0, %c0_i32 : i32, i32
  }
}

</mosaic_0001>

<llo_original>
// kernel: tpu_custom_call.1
$region0: #{tpu_custom_call.1}
  #allocation0 [shape = 'u32[]', space=smem, size = 0x4, offset = 0x4, fixed_abs, tag = 'smem constant byte address 0x4 - core index']
  #allocation1 [shape = 'u32[72,128]{1,0:T(1,128)}', space=vmem, size = 0x9000, scoped, tag = 'internal scratch']
  #allocation2 [shape = 'f32[1]{0:T(128)S(6)}', space=smem, size = 0x200, scoped, tag = 'scoped memory for tpu_custom_call.1']
  %s0 = inlined_call_operand.vmem [shape: f32[8,32], index: 0, kind: input, shape index: {}]
  %s1 = inlined_call_operand.vmem [shape: f32[32,1], index: 1, kind: input, shape index: {}]
  %s2 = inlined_call_operand.<no memory space> [shape: f32[1], index: 2, kind: input, shape index: {}]
  %s3 = inlined_call_operand.vmem [shape: f32[128,1], index: 3, kind: output, shape index: {}]
  %s4 = sld [smem:[#allocation0]]
  $region22: #{tpu_custom_call.1} parent=0
    _
  %s6 = ssub.s32 1, %s4
  %s7 = scalar_select 0, %s6, %s4
  %8 = sst [smem:[#allocation2]] %s2
  // Predicated region
  $region2: #{tpu_custom_call.1} parent=0 // pred_check
    _
  $region3: #{tpu_custom_call.1} parent=0 // pred_check_branch
    %10 = sbr.rel (0) target = $region5
  $region4: #{tpu_custom_call.1} parent=0 // pred_region
    _
  $region5: #{tpu_custom_call.1} parent=0 // pred_fallthru
    _
  // Predicated region
  $region6: #{tpu_custom_call.1} parent=0 // pred_check
    _
  $region7: #{tpu_custom_call.1} parent=0 // pred_check_branch
    %12 = sbr.rel (0) target = $region9
  $region8: #{tpu_custom_call.1} parent=0 // pred_region
    _
  $region9: #{tpu_custom_call.1} parent=0 // pred_fallthru
    _
  // Predicated region
  $region10: #{tpu_custom_call.1} parent=0 // pred_check
    _
  $region11: #{tpu_custom_call.1} parent=0 // pred_check_branch
    %14 = sbr.rel (0) target = $region13
  $region12: #{tpu_custom_call.1} parent=0 // pred_region
    _
  $region13: #{tpu_custom_call.1} parent=0 // pred_fallthru
    _
  %v15 = vld [vmem:[%s0] sm:$0xff]
  %v16 = vld [vmem:[%s0 + $0x8] sm:$0xff]
  %v17 = vld [vmem:[%s0 + $0x10] sm:$0xff]
  %v18 = vld [vmem:[%s0 + $0x18] sm:$0xff]
  %v19 = vld [vmem:[%s0 + $0x20] sm:$0xff]
  %v20 = vld [vmem:[%s0 + $0x28] sm:$0xff]
  %v21 = vld [vmem:[%s0 + $0x30] sm:$0xff]
  %v22 = vld [vmem:[%s0 + $0x38] sm:$0xff]
  %v23 = vld [vmem:[%s0 + $0x40] sm:$0xff]
  %v24 = vld [vmem:[%s0 + $0x48] sm:$0xff]
  %v25 = vld [vmem:[%s0 + $0x50] sm:$0xff]
  %v26 = vld [vmem:[%s0 + $0x58] sm:$0xff]
  %v27 = vld [vmem:[%s0 + $0x60] sm:$0xff]
  %v28 = vld [vmem:[%s0 + $0x68] sm:$0xff]
  %v29 = vld [vmem:[%s0 + $0x70] sm:$0xff]
  %v30 = vld [vmem:[%s0 + $0x78] sm:$0xff]
  %v31 = vld [vmem:[%s1] sm:$0xff]
  %v32 = vld [vmem:[%s1 + $0x8] sm:$0xff]
  %v33 = vld [vmem:[%s1 + $0x10] sm:$0xff]
  %v34 = vld [vmem:[%s1 + $0x18] sm:$0xff]
  %s35 = sld [smem:[#allocation2]]
  %v36 = vstv %s35
  %vm37 = vcmask 261120
  %v39 = vsel %vm37, %v15, 0
  %v42 = vsel %vm37, %v16, 0
  %v45 = vsel %vm37, %v17, 0
  %v48 = vsel %vm37, %v18, 0
  %v51 = vsel %vm37, %v19, 0
  %v54 = vsel %vm37, %v20, 0
  %v57 = vsel %vm37, %v21, 0
  %v60 = vsel %vm37, %v22, 0
  %v63 = vsel %vm37, %v23, 0
  %v66 = vsel %vm37, %v24, 0
  %v69 = vsel %vm37, %v25, 0
  %v72 = vsel %vm37, %v26, 0
  %v75 = vsel %vm37, %v27, 0
  %v78 = vsel %vm37, %v28, 0
  %v81 = vsel %vm37, %v29, 0
  %v84 = vsel %vm37, %v30, 0
  %86 = vmatpush.msra.mxu0 0.0
  %87 = vmatpush.msra.mxu0 0.0
  %88 = vmatpush.msra.mxu0 0.0
  %89 = vmatpush.msra.mxu0 0.0
  %90 = vmatpush.msra.mxu0 0.0
  %91 = vmatpush.msra.mxu0 0.0
  %92 = vmatpush.msra.mxu0 0.0
  %93 = vmatpush.msra.mxu0 0.0
  %94 = vmatpush.msra.mxu0 0.0
  %95 = vmatpush.msra.mxu0 0.0
  %96 = vmatpush.msra.mxu0 0.0
  %97 = vmatpush.msra.mxu0 0.0
  %98 = vmatpush.msra.mxu0 %v34
  %99 = vmatpush.msra.mxu0 %v33
  %100 = vmatpush.msra.mxu0 %v32
  %101 = vmatpush.msra.mxu0 %v31
  %102 = vmatmul.f32.gmra.mxu0 %v39
  %v103 = vpop.f32.mrf.mxu0
  %v104 = vadd.f32 %v36, %v103
  %105 = vmatmul.f32.gmra.mxu0 %v42
  %v106 = vpop.f32.mrf.mxu0
  %v107 = vadd.f32 %v36, %v106
  %108 = vmatmul.f32.gmra.mxu0 %v45
  %v109 = vpop.f32.mrf.mxu0
  %v110 = vadd.f32 %v36, %v109
  %111 = vmatmul.f32.gmra.mxu0 %v48
  %v112 = vpop.f32.mrf.mxu0
  %v113 = vadd.f32 %v36, %v112
  %114 = vmatmul.f32.gmra.mxu0 %v51
  %v115 = vpop.f32.mrf.mxu0
  %v116 = vadd.f32 %v36, %v115
  %117 = vmatmul.f32.gmra.mxu0 %v54
  %v118 = vpop.f32.mrf.mxu0
  %v119 = vadd.f32 %v36, %v118
  %120 = vmatmul.f32.gmra.mxu0 %v57
  %v121 = vpop.f32.mrf.mxu0
  %v122 = vadd.f32 %v36, %v121
  %123 = vmatmul.f32.gmra.mxu0 %v60
  %v124 = vpop.f32.mrf.mxu0
  %v125 = vadd.f32 %v36, %v124
  %126 = vmatmul.f32.gmra.mxu0 %v63
  %v127 = vpop.f32.mrf.mxu0
  %v128 = vadd.f32 %v36, %v127
  %129 = vmatmul.f32.gmra.mxu0 %v66
  %v130 = vpop.f32.mrf.mxu0
  %v131 = vadd.f32 %v36, %v130
  %132 = vmatmul.f32.gmra.mxu0 %v69
  %v133 = vpop.f32.mrf.mxu0
  %v134 = vadd.f32 %v36, %v133
  %135 = vmatmul.f32.gmra.mxu0 %v72
  %v136 = vpop.f32.mrf.mxu0
  %v137 = vadd.f32 %v36, %v136
  %138 = vmatmul.f32.gmra.mxu0 %v75
  %v139 = vpop.f32.mrf.mxu0
  %v140 = vadd.f32 %v36, %v139
  %141 = vmatmul.f32.gmra.mxu0 %v78
  %v142 = vpop.f32.mrf.mxu0
  %v143 = vadd.f32 %v36, %v142
  %144 = vmatmul.f32.gmra.mxu0 %v81
  %v145 = vpop.f32.mrf.mxu0
  %v146 = vadd.f32 %v36, %v145
  %147 = vmatmul.f32.gmra.mxu0 %v84
  %v148 = vpop.f32.mrf.mxu0
  %v149 = vadd.f32 %v36, %v148
  %150 = vdwg.mxu0
  %vm151 = vcmask 7168
  %152 = vst.msk [vmem:[%s3] sm:$0xff] %vm151, %v104
  %153 = vst.msk [vmem:[%s3 + $0x8] sm:$0xff] %vm151, %v107
  %154 = vst.msk [vmem:[%s3 + $0x10] sm:$0xff] %vm151, %v110
  %155 = vst.msk [vmem:[%s3 + $0x18] sm:$0xff] %vm151, %v113
  %156 = vst.msk [vmem:[%s3 + $0x20] sm:$0xff] %vm151, %v116
  %157 = vst.msk [vmem:[%s3 + $0x28] sm:$0xff] %vm151, %v119
  %158 = vst.msk [vmem:[%s3 + $0x30] sm:$0xff] %vm151, %v122
  %159 = vst.msk [vmem:[%s3 + $0x38] sm:$0xff] %vm151, %v125
  %160 = vst.msk [vmem:[%s3 + $0x40] sm:$0xff] %vm151, %v128
  %161 = vst.msk [vmem:[%s3 + $0x48] sm:$0xff] %vm151, %v131
  %162 = vst.msk [vmem:[%s3 + $0x50] sm:$0xff] %vm151, %v134
  %163 = vst.msk [vmem:[%s3 + $0x58] sm:$0xff] %vm151, %v137
  %164 = vst.msk [vmem:[%s3 + $0x60] sm:$0xff] %vm151, %v140
  %165 = vst.msk [vmem:[%s3 + $0x68] sm:$0xff] %vm151, %v143
  %166 = vst.msk [vmem:[%s3 + $0x70] sm:$0xff] %vm151, %v146
  %167 = vst.msk [vmem:[%s3 + $0x78] sm:$0xff] %vm151, %v149
  // Predicated region
  $region14: #{tpu_custom_call.1} parent=0 // pred_check
    _
  $region15: #{tpu_custom_call.1} parent=0 // pred_check_branch
    %169 = sbr.rel (0) target = $region17
  $region16: #{tpu_custom_call.1} parent=0 // pred_region
    _
  $region17: #{tpu_custom_call.1} parent=0 // pred_fallthru
    _
  // Predicated region
  $region18: #{tpu_custom_call.1} parent=0 // pred_check
    _
  $region19: #{tpu_custom_call.1} parent=0 // pred_check_branch
    %171 = sbr.rel (0) target = $region21
  $region20: #{tpu_custom_call.1} parent=0 // pred_region
    _
  $region21: #{tpu_custom_call.1} parent=0 // pred_fallthru
    _

</llo_original>
